<compile_context>
chip_gen: v5e
topology: v5e:2x2
jax: 0.10.0
libtpu: 0.0.40
codegen_flags: <defaults>
</compile_context>

<pallas_src>
import math
import functools

import jax
import jax.numpy as jnp
from jax.experimental import pallas as pl
from jax.experimental.pallas import tpu as pltpu


def _trans_attention_kernel(xq_ref, xkv_ref, wq_ref, bq_ref, wk_ref, bk_ref,
                            wo_ref, bo_ref, gamma_ref, beta_ref, o_ref,
                            *, num_heads, head_size, ln_eps, matmul_dtype):
    f32 = jnp.float32
    H = num_heads * head_size

    x_q = xq_ref[0]                                   # (tq, H)  query rows + residual (f32)
    x_kv = xkv_ref[0]                                 # (S,  H)  full sequence for K/V

    tq = x_q.shape[0]
    S = x_kv.shape[0]

    # Params loaded / broadcast once (hoisted — no re-broadcast inside any loop).
    bq = bq_ref[...].astype(f32)                      # (1, H)
    bk = bk_ref[...].astype(f32)                      # (1, H)
    bo = bo_ref[...].astype(f32)                      # (1, H)
    gamma = gamma_ref[...].astype(f32)                # (1, H)
    beta = beta_ref[...].astype(f32)                  # (1, H)

    # MXU operands in matmul_dtype (bf16 by default), f32 accumulation.
    xq_m = x_q.astype(matmul_dtype)
    xkv_m = x_kv.astype(matmul_dtype)
    wq = wq_ref[...].astype(matmul_dtype)             # (H, H)
    wk = wk_ref[...].astype(matmul_dtype)             # (H, H)
    wo = wo_ref[...].astype(matmul_dtype)             # (H, H)

    scale = 1.0 / math.sqrt(head_size)

    # Q projection for this query tile; fold the 1/sqrt(d) scale into q.
    q = (jnp.dot(xq_m, wq, preferred_element_type=f32) + bq) * scale   # (tq, H) f32
    # K projection for the full sequence.  value_states = self.key(...) -> V == K.
    k = jnp.dot(xkv_m, wk, preferred_element_type=f32) + bk            # (S, H) f32

    # Batch all heads into one contraction: (h, q, d) x (h, k, d) -> (h, q, k).
    qh = jnp.transpose(q.reshape(tq, num_heads, head_size), (1, 0, 2)).astype(matmul_dtype)
    kh = jnp.transpose(k.reshape(S, num_heads, head_size), (1, 0, 2)).astype(matmul_dtype)

    scores = jnp.einsum("hqd,hkd->hqk", qh, kh,
                        preferred_element_type=f32)                    # (nh, tq, S) f32
    scores = scores - jnp.max(scores, axis=-1, keepdims=True)          # one fused reduce
    e = jnp.exp(scores)
    probs = e * pl.reciprocal(jnp.sum(e, axis=-1, keepdims=True), approx=True)

    # Context for all heads at once (V == K), then back to (tq, H).
    ctx_h = jnp.einsum("hqk,hkd->hqd", probs.astype(matmul_dtype), kh,
                       preferred_element_type=f32)                     # (nh, tq, d)
    ctx = jnp.transpose(ctx_h, (1, 0, 2)).reshape(tq, H)                # (tq, H)

    # Output dense + residual + LayerNorm (f32 statistics).
    proj = jnp.dot(ctx.astype(matmul_dtype), wo, preferred_element_type=f32) + bo
    y = proj + x_q.astype(f32)
    mean = jnp.mean(y, axis=-1, keepdims=True)
    var = jnp.mean(jnp.square(y - mean), axis=-1, keepdims=True)
    y = (y - mean) * jax.lax.rsqrt(var + ln_eps)
    y = y * gamma + beta

    o_ref[0] = y.astype(o_ref.dtype)


def trans_attention(x, params, *, num_heads, layer_norm_eps=1e-10,
                    q_tile=128, matmul_dtype=jnp.bfloat16):
    """x: (B, S, H) float32.  params: dict of pre-transposed (in, out) weights."""
    B, S, H = x.shape
    assert H % num_heads == 0
    head_size = H // num_heads

    # Query-row tiling: one (b, q-tile) pair per grid step.
    tq = S if S <= q_tile else q_tile
    if tq < S:
        assert S % tq == 0 and tq % 8 == 0, "q_tile must divide S and be a multiple of 8"
    n_qt = S // tq

    kernel = functools.partial(_trans_attention_kernel,
                               num_heads=num_heads,
                               head_size=head_size,
                               ln_eps=layer_norm_eps,
                               matmul_dtype=matmul_dtype)

    full2d = lambda b, qi: (0, 0)
    w_spec = pl.BlockSpec((H, H), full2d)
    v_spec = pl.BlockSpec((1, H), full2d)

    # Explicit VMEM budget (bytes, f32) with 2x headroom, clamped to a safe range.
    est = 4 * (2 * 3 * H * H            # double-buffered weight tiles
               + 2 * 5 * H              # bias / LN params
               + 2 * S * H              # x (kv view)
               + 4 * tq * H             # x (q view) + out block
               + 2 * (tq * H + S * H)   # q / k (f32 + matmul-dtype copies)
               + 3 * num_heads * tq * S # scores / exp / probs
               + 4 * tq * H)            # ctx / proj / y
    vmem_limit = int(max(32 * 1024 * 1024, min(64 * 1024 * 1024, 2 * est)))

    return pl.pallas_call(
        kernel,
        out_shape=jax.ShapeDtypeStruct((B, S, H), x.dtype),
        grid_spec=pltpu.PrefetchScalarGridSpec(
            num_scalar_prefetch=0,
            grid=(B, n_qt),
            in_specs=[
                pl.BlockSpec((1, tq, H), lambda b, qi: (b, qi, 0)),  # x: query rows + residual
                pl.BlockSpec((1, S, H),  lambda b, qi: (b, 0, 0)),   # x: full seq for K/V
                w_spec, v_spec,                                      # query W, b
                w_spec, v_spec,                                      # key   W, b
                w_spec, v_spec,                                      # out   W, b
                v_spec, v_spec,                                      # LN gamma, beta
            ],
            out_specs=pl.BlockSpec((1, tq, H), lambda b, qi: (b, qi, 0)),
        ),
        compiler_params=pltpu.CompilerParams(
            dimension_semantics=("parallel", "parallel"),
            vmem_limit_bytes=vmem_limit),
    )(x, x,
      params["wq"], params["bq"],
      params["wk"], params["bk"],
      params["wo"], params["bo"],
      params["gamma"], params["beta"])


def _reference(x, params, num_heads, ln_eps):
    """Pure-JAX f32 reference mirroring the PyTorch module semantics."""
    B, S, H = x.shape
    d = H // num_heads
    q = x @ params["wq"] + params["bq"]
    k = x @ params["wk"] + params["bk"]
    v = k  # value_states = self.key(hidden_states)

    def split(t):  # (B,S,H) -> (B,nh,S,d)
        return t.reshape(B, S, num_heads, d).transpose(0, 2, 1, 3)

    qh, kh, vh = split(q), split(k), split(v)
    scores = jnp.einsum("bhqd,bhkd->bhqk", qh, kh) / math.sqrt(d)
    probs = jax.nn.softmax(scores, axis=-1)
    ctx = jnp.einsum("bhqk,bhkd->bhqd", probs, vh)
    ctx = ctx.transpose(0, 2, 1, 3).reshape(B, S, H)
    proj = ctx @ params["wo"] + params["bo"]
    y = proj + x
    mean = jnp.mean(y, axis=-1, keepdims=True)
    var = jnp.mean((y - mean) ** 2, axis=-1, keepdims=True)
    y = (y - mean) / jnp.sqrt(var + ln_eps)
    return y * params["gamma"] + params["beta"]


if __name__ == "__main__":
    # Small config consistent with the module: hidden_size=32, num_heads=4.
    B, S, H = 2, 8, 32
    num_heads = 4
    ln_eps = 1e-10

    key = jax.random.PRNGKey(0)
    ks = jax.random.split(key, 8)
    init = 0.02
    params = {
        # weights stored as (in, out) == PyTorch weight.T
        "wq": init * jax.random.normal(ks[0], (H, H), jnp.float32),
        "bq": init * jax.random.normal(ks[1], (1, H), jnp.float32),
        "wk": init * jax.random.normal(ks[2], (H, H), jnp.float32),
        "bk": init * jax.random.normal(ks[3], (1, H), jnp.float32),
        "wo": init * jax.random.normal(ks[4], (H, H), jnp.float32),
        "bo": init * jax.random.normal(ks[5], (1, H), jnp.float32),
        # LayerNorm default init: gamma=1, beta=0
        "gamma": jnp.ones((1, H), jnp.float32),
        "beta": jnp.zeros((1, H), jnp.float32),
    }
    x = jax.random.normal(ks[6], (B, S, H), jnp.float32)

    ref = _reference(x, params, num_heads, ln_eps)

    # f32-MXU path: tight check against the pure-JAX reference.
    out_f32 = jax.block_until_ready(
        trans_attention(x, params, num_heads=num_heads, layer_norm_eps=ln_eps,
                        matmul_dtype=jnp.float32))
    assert out_f32.shape == (B, S, H)
    assert jnp.allclose(out_f32, ref, atol=1e-4, rtol=1e-4), "f32 path mismatch vs reference"

    # bf16-MXU path (default, ~2x MXU throughput): looser tolerance.
    out_bf16 = jax.block_until_ready(
        trans_attention(x, params, num_heads=num_heads, layer_norm_eps=ln_eps))
    assert out_bf16.shape == (B, S, H)
    assert jnp.allclose(out_bf16, ref, atol=5e-3, rtol=5e-3), "bf16 path mismatch vs reference"

    print("KERNEL_OK")
</pallas_src>

<mosaic_0001>
module attributes {stable_mosaic.version = 11 : i64} {
  func.func @_trans_attention_kernel(%arg0: i32, %arg1: i32, %arg2: memref<1x8x32xf32, #tpu.memory_space<vmem>>, %arg3: memref<1x8x32xf32, #tpu.memory_space<vmem>>, %arg4: memref<32x32xf32, #tpu.memory_space<vmem>>, %arg5: memref<1x32xf32, #tpu.memory_space<vmem>>, %arg6: memref<32x32xf32, #tpu.memory_space<vmem>>, %arg7: memref<1x32xf32, #tpu.memory_space<vmem>>, %arg8: memref<32x32xf32, #tpu.memory_space<vmem>>, %arg9: memref<1x32xf32, #tpu.memory_space<vmem>>, %arg10: memref<1x32xf32, #tpu.memory_space<vmem>>, %arg11: memref<1x32xf32, #tpu.memory_space<vmem>>, %arg12: memref<1x8x32xf32, #tpu.memory_space<vmem>>) attributes {dimension_semantics = [#tpu.dimension_semantics<parallel>, #tpu.dimension_semantics<parallel>], iteration_bounds = array<i64: 2, 1>, scalar_prefetch = 0 : i64, scratch_operands = 0 : i64, tpu.core_type = #tpu.core_type<tc>, window_params = [{transform_indices = @transform_0, window_bounds = array<i64: 1, 8, 32>}, {transform_indices = @transform_1, window_bounds = array<i64: 1, 8, 32>}, {pipeline_mode = #tpu.pipeline_mode<synchronous>, transform_indices = @transform_2, window_bounds = array<i64: 32, 32>}, {pipeline_mode = #tpu.pipeline_mode<synchronous>, transform_indices = @transform_3, window_bounds = array<i64: 1, 32>}, {pipeline_mode = #tpu.pipeline_mode<synchronous>, transform_indices = @transform_4, window_bounds = array<i64: 32, 32>}, {pipeline_mode = #tpu.pipeline_mode<synchronous>, transform_indices = @transform_5, window_bounds = array<i64: 1, 32>}, {pipeline_mode = #tpu.pipeline_mode<synchronous>, transform_indices = @transform_6, window_bounds = array<i64: 32, 32>}, {pipeline_mode = #tpu.pipeline_mode<synchronous>, transform_indices = @transform_7, window_bounds = array<i64: 1, 32>}, {pipeline_mode = #tpu.pipeline_mode<synchronous>, transform_indices = @transform_8, window_bounds = array<i64: 1, 32>}, {pipeline_mode = #tpu.pipeline_mode<synchronous>, transform_indices = @transform_9, window_bounds = array<i64: 1, 32>}, {transform_indices = @transform_10, window_bounds = array<i64: 1, 8, 32>}]} {
    %c0 = arith.constant 0 : index
    %c0_0 = arith.constant 0 : index
    %c0_1 = arith.constant 0 : index
    %0 = vector.load %arg2[%c0, %c0_0, %c0_1] : memref<1x8x32xf32, #tpu.memory_space<vmem>>, vector<1x8x32xf32>
    %1 = vector.shape_cast %0 : vector<1x8x32xf32> to vector<8x32xf32>
    %c0_2 = arith.constant 0 : index
    %c0_3 = arith.constant 0 : index
    %c0_4 = arith.constant 0 : index
    %2 = vector.load %arg3[%c0_2, %c0_3, %c0_4] : memref<1x8x32xf32, #tpu.memory_space<vmem>>, vector<1x8x32xf32>
    %3 = vector.shape_cast %2 : vector<1x8x32xf32> to vector<8x32xf32>
    %c0_5 = arith.constant 0 : index
    %c0_6 = arith.constant 0 : index
    %4 = vector.load %arg5[%c0_5, %c0_6] : memref<1x32xf32, #tpu.memory_space<vmem>>, vector<1x32xf32>
    %c0_7 = arith.constant 0 : index
    %c0_8 = arith.constant 0 : index
    %5 = vector.load %arg7[%c0_7, %c0_8] : memref<1x32xf32, #tpu.memory_space<vmem>>, vector<1x32xf32>
    %c0_9 = arith.constant 0 : index
    %c0_10 = arith.constant 0 : index
    %6 = vector.load %arg9[%c0_9, %c0_10] : memref<1x32xf32, #tpu.memory_space<vmem>>, vector<1x32xf32>
    %c0_11 = arith.constant 0 : index
    %c0_12 = arith.constant 0 : index
    %7 = vector.load %arg10[%c0_11, %c0_12] : memref<1x32xf32, #tpu.memory_space<vmem>>, vector<1x32xf32>
    %c0_13 = arith.constant 0 : index
    %c0_14 = arith.constant 0 : index
    %8 = vector.load %arg11[%c0_13, %c0_14] : memref<1x32xf32, #tpu.memory_space<vmem>>, vector<1x32xf32>
    %c0_15 = arith.constant 0 : index
    %c0_16 = arith.constant 0 : index
    %9 = vector.load %arg4[%c0_15, %c0_16] : memref<32x32xf32, #tpu.memory_space<vmem>>, vector<32x32xf32>
    %c0_17 = arith.constant 0 : index
    %c0_18 = arith.constant 0 : index
    %10 = vector.load %arg6[%c0_17, %c0_18] : memref<32x32xf32, #tpu.memory_space<vmem>>, vector<32x32xf32>
    %c0_19 = arith.constant 0 : index
    %c0_20 = arith.constant 0 : index
    %11 = vector.load %arg8[%c0_19, %c0_20] : memref<32x32xf32, #tpu.memory_space<vmem>>, vector<32x32xf32>
    %cst = arith.constant dense<0.000000e+00> : vector<8x32xf32>
    %12 = tpu.matmul %1, %9, %cst {dimension_numbers = #tpu.dot_dimension_numbers<[1], [0], [0], [1], [0, 0, 1, 1], [], []>} : vector<8x32xf32>, vector<32x32xf32>, vector<8x32xf32> -> vector<8x32xf32>
    %13 = vector.broadcast %4 : vector<1x32xf32> to vector<8x32xf32>
    %14 = arith.addf %12, %13 : vector<8x32xf32>
    %cst_21 = arith.constant 0.353553385 : f32
    %15 = vector.broadcast %cst_21 : f32 to vector<8x32xf32>
    %16 = arith.mulf %14, %15 : vector<8x32xf32>
    %cst_22 = arith.constant dense<0.000000e+00> : vector<8x32xf32>
    %17 = tpu.matmul %3, %10, %cst_22 {dimension_numbers = #tpu.dot_dimension_numbers<[1], [0], [0], [1], [0, 0, 1, 1], [], []>} : vector<8x32xf32>, vector<32x32xf32>, vector<8x32xf32> -> vector<8x32xf32>
    %18 = vector.broadcast %5 : vector<1x32xf32> to vector<8x32xf32>
    %19 = arith.addf %17, %18 : vector<8x32xf32>
    %20 = vector.shape_cast %16 : vector<8x32xf32> to vector<8x4x8xf32>
    %21 = tpu.transpose %20, [1, 0, 2] : vector<8x4x8xf32> -> vector<4x8x8xf32>
    %22 = vector.shape_cast %19 : vector<8x32xf32> to vector<8x4x8xf32>
    %23 = tpu.transpose %22, [1, 0, 2] : vector<8x4x8xf32> -> vector<4x8x8xf32>
    "tpu.trace_start"() <{level = 10 : i32, message = "hqd,hkd->hqk"}> : () -> ()
    %cst_23 = arith.constant dense<0.000000e+00> : vector<4x8x8xf32>
    %24 = tpu.matmul %21, %23, %cst_23 {dimension_numbers = #tpu.dot_dimension_numbers<[2], [2], [1], [1], [0, 0, 0, 1, 1, 1], [0], [0]>} : vector<4x8x8xf32>, vector<4x8x8xf32>, vector<4x8x8xf32> -> vector<4x8x8xf32>
    "tpu.trace_stop"() : () -> ()
    %cst_24 = arith.constant dense<0xFF800000> : vector<4x8xf32>
    %25 = vector.multi_reduction <maximumf>, %24, %cst_24 [2] : vector<4x8x8xf32> to vector<4x8xf32>
    %26 = vector.shape_cast %25 : vector<4x8xf32> to vector<4x8x1xf32>
    %27 = vector.broadcast %26 : vector<4x8x1xf32> to vector<4x8x8xf32>
    %28 = arith.subf %24, %27 : vector<4x8x8xf32>
    %29 = math.exp %28 : vector<4x8x8xf32>
    %cst_25 = arith.constant dense<0.000000e+00> : vector<4x8xf32>
    %30 = vector.multi_reduction <add>, %29, %cst_25 [2] : vector<4x8x8xf32> to vector<4x8xf32>
    %31 = vector.shape_cast %30 : vector<4x8xf32> to vector<4x8x1xf32>
    %32 = tpu.reciprocal %31 {approx = true} : vector<4x8x1xf32> -> vector<4x8x1xf32>
    %33 = vector.broadcast %32 : vector<4x8x1xf32> to vector<4x8x8xf32>
    %34 = arith.mulf %29, %33 : vector<4x8x8xf32>
    "tpu.trace_start"() <{level = 10 : i32, message = "hqk,hkd->hqd"}> : () -> ()
    %cst_26 = arith.constant dense<0.000000e+00> : vector<4x8x8xf32>
    %35 = tpu.matmul %34, %23, %cst_26 {dimension_numbers = #tpu.dot_dimension_numbers<[2], [1], [1], [2], [0, 0, 0, 1, 1, 2], [0], [0]>} : vector<4x8x8xf32>, vector<4x8x8xf32>, vector<4x8x8xf32> -> vector<4x8x8xf32>
    "tpu.trace_stop"() : () -> ()
    %36 = tpu.transpose %35, [1, 0, 2] : vector<4x8x8xf32> -> vector<8x4x8xf32>
    %37 = vector.shape_cast %36 : vector<8x4x8xf32> to vector<8x32xf32>
    %cst_27 = arith.constant dense<0.000000e+00> : vector<8x32xf32>
    %38 = tpu.matmul %37, %11, %cst_27 {dimension_numbers = #tpu.dot_dimension_numbers<[1], [0], [0], [1], [0, 0, 1, 1], [], []>} : vector<8x32xf32>, vector<32x32xf32>, vector<8x32xf32> -> vector<8x32xf32>
    %39 = vector.broadcast %6 : vector<1x32xf32> to vector<8x32xf32>
    %40 = arith.addf %38, %39 : vector<8x32xf32>
    %41 = arith.addf %40, %1 : vector<8x32xf32>
    %cst_28 = arith.constant dense<0.000000e+00> : vector<8xf32>
    %42 = vector.multi_reduction <add>, %41, %cst_28 [1] : vector<8x32xf32> to vector<8xf32>
    %43 = vector.shape_cast %42 : vector<8xf32> to vector<8x1xf32>
    %cst_29 = arith.constant 3.200000e+01 : f32
    %44 = vector.broadcast %cst_29 : f32 to vector<8x1xf32>
    %45 = arith.divf %43, %44 : vector<8x1xf32>
    %46 = vector.broadcast %45 : vector<8x1xf32> to vector<8x32xf32>
    %47 = arith.subf %41, %46 : vector<8x32xf32>
    %48 = arith.mulf %47, %47 : vector<8x32xf32>
    %cst_30 = arith.constant dense<0.000000e+00> : vector<8xf32>
    %49 = vector.multi_reduction <add>, %48, %cst_30 [1] : vector<8x32xf32> to vector<8xf32>
    %50 = vector.shape_cast %49 : vector<8xf32> to vector<8x1xf32>
    %cst_31 = arith.constant 3.200000e+01 : f32
    %51 = vector.broadcast %cst_31 : f32 to vector<8x1xf32>
    %52 = arith.divf %50, %51 : vector<8x1xf32>
    %53 = vector.broadcast %45 : vector<8x1xf32> to vector<8x32xf32>
    %54 = arith.subf %41, %53 : vector<8x32xf32>
    %cst_32 = arith.constant 1.000000e-10 : f32
    %55 = vector.broadcast %cst_32 : f32 to vector<8x1xf32>
    %56 = arith.addf %52, %55 : vector<8x1xf32>
    %57 = math.rsqrt %56 : vector<8x1xf32>
    %58 = vector.broadcast %57 : vector<8x1xf32> to vector<8x32xf32>
    %59 = arith.mulf %54, %58 : vector<8x32xf32>
    %60 = vector.broadcast %7 : vector<1x32xf32> to vector<8x32xf32>
    %61 = arith.mulf %59, %60 : vector<8x32xf32>
    %62 = vector.broadcast %8 : vector<1x32xf32> to vector<8x32xf32>
    %63 = arith.addf %61, %62 : vector<8x32xf32>
    %c0_33 = arith.constant 0 : index
    %c0_34 = arith.constant 0 : index
    %c0_35 = arith.constant 0 : index
    %64 = vector.load %arg12[%c0_33, %c0_34, %c0_35] : memref<1x8x32xf32, #tpu.memory_space<vmem>>, vector<1x8x32xf32>
    %65 = vector.shape_cast %64 : vector<1x8x32xf32> to vector<8x32xf32>
    %66 = vector.shape_cast %63 : vector<8x32xf32> to vector<1x8x32xf32>
    tpu.vector_store %arg12[%c0_33, %c0_34, %c0_35], %66 {strides = array<i32>} : memref<1x8x32xf32, #tpu.memory_space<vmem>>, vector<1x8x32xf32>,
    return
  }
  func.func @transform_0(%arg0: i32, %arg1: i32) -> (i32, i32, i32) {
    %c0_i32 = arith.constant 0 : i32
    %c0_i32_0 = arith.constant 0 : i32
    return %arg0, %arg1, %c0_i32 : i32, i32, i32
  }
  func.func @transform_1(%arg0: i32, %arg1: i32) -> (i32, i32, i32) {
    %c0_i32 = arith.constant 0 : i32
    %c0_i32_0 = arith.constant 0 : i32
    %c0_i32_1 = arith.constant 0 : i32
    return %arg0, %c0_i32, %c0_i32_0 : i32, i32, i32
  }
  func.func @transform_2(%arg0: i32, %arg1: i32) -> (i32, i32) {
    %c0_i32 = arith.constant 0 : i32
    %c0_i32_0 = arith.constant 0 : i32
    %c0_i32_1 = arith.constant 0 : i32
    return %c0_i32, %c0_i32_0 : i32, i32
  }
  func.func @transform_3(%arg0: i32, %arg1: i32) -> (i32, i32) {
    %c0_i32 = arith.constant 0 : i32
    %c0_i32_0 = arith.constant 0 : i32
    %c0_i32_1 = arith.constant 0 : i32
    return %c0_i32, %c0_i32_0 : i32, i32
  }
  func.func @transform_4(%arg0: i32, %arg1: i32) -> (i32, i32) {
    %c0_i32 = arith.constant 0 : i32
    %c0_i32_0 = arith.constant 0 : i32
    %c0_i32_1 = arith.constant 0 : i32
    return %c0_i32, %c0_i32_0 : i32, i32
  }
  func.func @transform_5(%arg0: i32, %arg1: i32) -> (i32, i32) {
    %c0_i32 = arith.constant 0 : i32
    %c0_i32_0 = arith.constant 0 : i32
    %c0_i32_1 = arith.constant 0 : i32
    return %c0_i32, %c0_i32_0 : i32, i32
  }
  func.func @transform_6(%arg0: i32, %arg1: i32) -> (i32, i32) {
    %c0_i32 = arith.constant 0 : i32
    %c0_i32_0 = arith.constant 0 : i32
    %c0_i32_1 = arith.constant 0 : i32
    return %c0_i32, %c0_i32_0 : i32, i32
  }
  func.func @transform_7(%arg0: i32, %arg1: i32) -> (i32, i32) {
    %c0_i32 = arith.constant 0 : i32
    %c0_i32_0 = arith.constant 0 : i32
    %c0_i32_1 = arith.constant 0 : i32
    return %c0_i32, %c0_i32_0 : i32, i32
  }
  func.func @transform_8(%arg0: i32, %arg1: i32) -> (i32, i32) {
    %c0_i32 = arith.constant 0 : i32
    %c0_i32_0 = arith.constant 0 : i32
    %c0_i32_1 = arith.constant 0 : i32
    return %c0_i32, %c0_i32_0 : i32, i32
  }
  func.func @transform_9(%arg0: i32, %arg1: i32) -> (i32, i32) {
    %c0_i32 = arith.constant 0 : i32
    %c0_i32_0 = arith.constant 0 : i32
    %c0_i32_1 = arith.constant 0 : i32
    return %c0_i32, %c0_i32_0 : i32, i32
  }
  func.func @transform_10(%arg0: i32, %arg1: i32) -> (i32, i32, i32) {
    %c0_i32 = arith.constant 0 : i32
    %c0_i32_0 = arith.constant 0 : i32
    return %arg0, %arg1, %c0_i32 : i32, i32, i32
  }
}

</mosaic_0001>

<llo_original>
// kernel: tpu_custom_call.1
$region0: #{tpu_custom_call.1}
  #allocation0 [shape = 'u32[]', space=smem, size = 0x4, offset = 0x4, fixed_abs, tag = 'smem constant byte address 0x4 - core index']
  #allocation1 [shape = 'u32[72,128]{1,0:T(1,128)}', space=vmem, size = 0x9000, scoped, tag = 'internal scratch']
  %s0 = inlined_call_operand.hbm [shape: f32[2,8,32], index: 0, kind: input, shape index: {}]
  %s1 = inlined_call_operand.hbm [shape: f32[2,8,32], index: 1, kind: input, shape index: {}]
  %s2 = inlined_call_operand.hbm [shape: f32[32,32], index: 2, kind: input, shape index: {}]
  %s3 = inlined_call_operand.vmem [shape: f32[1,32], index: 3, kind: input, shape index: {}]
  %s4 = inlined_call_operand.hbm [shape: f32[32,32], index: 4, kind: input, shape index: {}]
  %s5 = inlined_call_operand.vmem [shape: f32[1,32], index: 5, kind: input, shape index: {}]
  %s6 = inlined_call_operand.hbm [shape: f32[32,32], index: 6, kind: input, shape index: {}]
  %s7 = inlined_call_operand.vmem [shape: f32[1,32], index: 7, kind: input, shape index: {}]
  %s8 = inlined_call_operand.vmem [shape: f32[1,32], index: 8, kind: input, shape index: {}]
  %s9 = inlined_call_operand.vmem [shape: f32[1,32], index: 9, kind: input, shape index: {}]
  %s10 = inlined_call_operand.hbm [shape: f32[2,8,32], index: 10, kind: output, shape index: {}]
  %s11 = sld [smem:[#allocation0]]
  $region93: #{tpu_custom_call.1} parent=0
    _
  %s13 = ssub.s32 1, %s11
  %s14 = scalar_select 0, %s13, %s11
  $region1: #{tpu_custom_call.1} parent=0
    #allocation2 [shape = 'u8[8192]{0}', space=vmem, size = 0x2000, scoped, tag = 'input window, operand 0']
    #allocation3 [shape = 's32[2]{0}', space=sflag, size = 0x8, scoped, tag = 'scoped memory for tpu_custom_call.1']
    #allocation4 [shape = 's32[2]{0}', space=sflag, size = 0x8, scoped, tag = 'scoped memory for tpu_custom_call.1']
    #allocation5 [shape = 'u8[8192]{0}', space=vmem, size = 0x2000, scoped, tag = 'input window, operand 1']
    #allocation6 [shape = 's32[2]{0}', space=sflag, size = 0x8, scoped, tag = 'scoped memory for tpu_custom_call.1']
    #allocation7 [shape = 'u8[16384]{0}', space=vmem, size = 0x4000, scoped, tag = 'input window, operand 2, single buffered']
    #allocation8 [shape = 'u8[16384]{0}', space=vmem, size = 0x4000, scoped, tag = 'input window, operand 4, single buffered']
    #allocation9 [shape = 's32[1]{0}', space=sflag, size = 0x4, scoped, tag = 'scoped memory for tpu_custom_call.1']
    #allocation10 [shape = 'u8[16384]{0}', space=vmem, size = 0x4000, scoped, tag = 'input window, operand 6, single buffered']
    #allocation11 [shape = 'u8[8192]{0}', space=vmem, size = 0x2000, scoped, tag = 'output window, operand 0']
    %15 = vsyncpa [#allocation3], 0
    %s16 = scalar_lea.sflag [#allocation3], 1
    %17 = vsyncpa %s16, 0
    %18 = vsyncpa [#allocation6], 0
    %s19 = scalar_lea.sflag [#allocation6], 1
    %20 = vsyncpa %s19, 0
    %21 = vsyncpa [#allocation9], 0
    %22 = vsyncpa [#allocation4], 0
    %s23 = scalar_lea.sflag [#allocation4], 1
    %24 = vsyncpa %s23, 0
    loop: start=0, step=1, limit=4
    $region2: #{tpu_custom_call.1} parent=1 // loop_pre_header
      _
    $region3: #{tpu_custom_call.1} parent=1 // loop_header
      %s26 = sphi 0, %s30
      %p27 = scmp.ge.s32.totalorder %s26, 4
      %s33 = sphi 0, %s45
      %s34 = sphi 0, %s41
      %s35 = sphi 0, %s33
      %s36 = sphi 0, %s34
      %s37 = sphi 0, %s35
      %s38 = sphi 0, %s36
      %s50 = sphi 0, %s52
      %s53 = sphi 0, %s50
      %s54 = sphi 0, %s53
      %s70 = sphi 0, %s54
      %s76 = sphi 0, %s78
      %s79 = sphi 0, %s76
      %s80 = sphi 0, %s79
      %s96 = sphi 0, %s80
      %s100 = sphi 0, %s100
      %s102 = sphi 0, %s100
      %s103 = sphi 0, %s102
      %s117 = sphi 0, %s103
      %s121 = sphi 0, %s121
      %s123 = sphi 0, %s121
      %s124 = sphi 0, %s123
      %s138 = sphi 0, %s124
      %s142 = sphi 0, %s142
      %s144 = sphi 0, %s142
      %s145 = sphi 0, %s144
      %s159 = sphi 0, %s145
      %s163 = sphi 0, %s163
      %s165 = sphi 0, %s163
      %s166 = sphi 0, %s165
      %s180 = sphi 0, %s166
      %s184 = sphi 0, %s184
      %s186 = sphi 0, %s184
      %s187 = sphi 0, %s186
      %s201 = sphi 0, %s187
      %s205 = sphi 0, %s205
      %s207 = sphi 0, %s205
      %s208 = sphi 0, %s207
      %s222 = sphi 0, %s208
      %s226 = sphi 0, %s226
      %s228 = sphi 0, %s226
      %s229 = sphi 0, %s228
      %s243 = sphi 0, %s229
      %s247 = sphi 0, %s247
      %s249 = sphi 0, %s247
      %s250 = sphi 0, %s249
      %s264 = sphi 0, %s250
      %s272 = sphi 0, %s274
      %s275 = sphi 0, %s272
      %s276 = sphi 0, %s275
      %s292 = sphi 0, %s276
    $region4: #{tpu_custom_call.1} parent=1 // loop_header_branch
      %29 = sbr.rel (%p27) target = $region8
    $region5: #{tpu_custom_call.1} parent=1 // loop_body
      %s31 = ssub.s32 %s26, 1
      %s32 = ssub.s32 %s26, 2
      %s39 = sadd.s32 1, %s34
      %p40 = scmp.ge.s32.totalorder %s39, 1
      %s41 = scalar_select %p40, 0, %s39
      %s42 = sadd.s32 1, %s33
      %s43 = scalar_select %p40, %s42, %s33
      %p44 = scmp.ge.s32.totalorder %s43, 2
      %s45 = scalar_select %p44, 0, %s43
      %s46 = ssub.s32 %s33, %s45
      %s47 = ssub.s32 %s34, %s41
      %s48 = sor.u32 %s46, %s47
      %p49 = scmp.eq.s32.totalorder %s48, 0
      %s51 = sadd.s32 %s50, 1
      %s52 = scalar_select %p49, %s50, %s51
      %p55 = pneg %p49
      %p56 = scmp.eq.s32.totalorder %s26, 1
      %p57 = por %p55, %p56
      %p58 = scmp.ne.s32.totalorder %s50, %s53
      %p59 = scmp.eq.s32.totalorder %s26, 0
      %p60 = por %p58, %p59
      %p61 = scmp.ne.s32.totalorder %s50, %s53
      %p62 = scmp.eq.s32.totalorder %s31, 1
      %p63 = por %p61, %p62
      %p64 = scmp.ne.s32.totalorder %s53, %s54
      %p65 = scmp.eq.s32.totalorder %s31, 0
      %p66 = por %p64, %p65
      %p67 = scmp.ne.s32.totalorder %s53, %s54
      %p68 = scmp.eq.s32.totalorder %s32, 1
      %p69 = por %p67, %p68
      %p71 = scmp.ne.s32.totalorder %s54, %s70
      %p72 = scmp.eq.s32.totalorder %s32, 0
      %p73 = por %p71, %p72
      %s74 = ssub.s32 %s33, %s45
      %p75 = scmp.eq.s32.totalorder %s74, 0
      %s77 = sadd.s32 %s76, 1
      %s78 = scalar_select %p75, %s76, %s77
      %p81 = pneg %p75
      %p82 = scmp.eq.s32.totalorder %s26, 1
      %p83 = por %p81, %p82
      %p84 = scmp.ne.s32.totalorder %s76, %s79
      %p85 = scmp.eq.s32.totalorder %s26, 0
      %p86 = por %p84, %p85
      %p87 = scmp.ne.s32.totalorder %s76, %s79
      %p88 = scmp.eq.s32.totalorder %s31, 1
      %p89 = por %p87, %p88
      %p90 = scmp.ne.s32.totalorder %s79, %s80
      %p91 = scmp.eq.s32.totalorder %s31, 0
      %p92 = por %p90, %p91
      %p93 = scmp.ne.s32.totalorder %s79, %s80
      %p94 = scmp.eq.s32.totalorder %s32, 1
      %p95 = por %p93, %p94
      %p97 = scmp.ne.s32.totalorder %s80, %s96
      %p98 = scmp.eq.s32.totalorder %s32, 0
      %p99 = por %p97, %p98
      %s101 = sadd.s32 %s100, 1
      %p104 = scmp.eq.s32.totalorder %s26, 1
      %p105 = scmp.ne.s32.totalorder %s100, %s102
      %p106 = scmp.eq.s32.totalorder %s26, 0
      %p107 = por %p105, %p106
      %p108 = scmp.ne.s32.totalorder %s100, %s102
      %p109 = scmp.eq.s32.totalorder %s31, 1
      %p110 = por %p108, %p109
      %p111 = scmp.ne.s32.totalorder %s102, %s103
      %p112 = scmp.eq.s32.totalorder %s31, 0
      %p113 = por %p111, %p112
      %p114 = scmp.ne.s32.totalorder %s102, %s103
      %p115 = scmp.eq.s32.totalorder %s32, 1
      %p116 = por %p114, %p115
      %p118 = scmp.ne.s32.totalorder %s103, %s117
      %p119 = scmp.eq.s32.totalorder %s32, 0
      %p120 = por %p118, %p119
      %s122 = sadd.s32 %s121, 1
      %p125 = scmp.eq.s32.totalorder %s26, 1
      %p126 = scmp.ne.s32.totalorder %s121, %s123
      %p127 = scmp.eq.s32.totalorder %s26, 0
      %p128 = por %p126, %p127
      %p129 = scmp.ne.s32.totalorder %s121, %s123
      %p130 = scmp.eq.s32.totalorder %s31, 1
      %p131 = por %p129, %p130
      %p132 = scmp.ne.s32.totalorder %s123, %s124
      %p133 = scmp.eq.s32.totalorder %s31, 0
      %p134 = por %p132, %p133
      %p135 = scmp.ne.s32.totalorder %s123, %s124
      %p136 = scmp.eq.s32.totalorder %s32, 1
      %p137 = por %p135, %p136
      %p139 = scmp.ne.s32.totalorder %s124, %s138
      %p140 = scmp.eq.s32.totalorder %s32, 0
      %p141 = por %p139, %p140
      %s143 = sadd.s32 %s142, 1
      %p146 = scmp.eq.s32.totalorder %s26, 1
      %p147 = scmp.ne.s32.totalorder %s142, %s144
      %p148 = scmp.eq.s32.totalorder %s26, 0
      %p149 = por %p147, %p148
      %p150 = scmp.ne.s32.totalorder %s142, %s144
      %p151 = scmp.eq.s32.totalorder %s31, 1
      %p152 = por %p150, %p151
      %p153 = scmp.ne.s32.totalorder %s144, %s145
      %p154 = scmp.eq.s32.totalorder %s31, 0
      %p155 = por %p153, %p154
      %p156 = scmp.ne.s32.totalorder %s144, %s145
      %p157 = scmp.eq.s32.totalorder %s32, 1
      %p158 = por %p156, %p157
      %p160 = scmp.ne.s32.totalorder %s145, %s159
      %p161 = scmp.eq.s32.totalorder %s32, 0
      %p162 = por %p160, %p161
      %s164 = sadd.s32 %s163, 1
      %p167 = scmp.eq.s32.totalorder %s26, 1
      %p168 = scmp.ne.s32.totalorder %s163, %s165
      %p169 = scmp.eq.s32.totalorder %s26, 0
      %p170 = por %p168, %p169
      %p171 = scmp.ne.s32.totalorder %s163, %s165
      %p172 = scmp.eq.s32.totalorder %s31, 1
      %p173 = por %p171, %p172
      %p174 = scmp.ne.s32.totalorder %s165, %s166
      %p175 = scmp.eq.s32.totalorder %s31, 0
      %p176 = por %p174, %p175
      %p177 = scmp.ne.s32.totalorder %s165, %s166
      %p178 = scmp.eq.s32.totalorder %s32, 1
      %p179 = por %p177, %p178
      %p181 = scmp.ne.s32.totalorder %s166, %s180
      %p182 = scmp.eq.s32.totalorder %s32, 0
      %p183 = por %p181, %p182
      %s185 = sadd.s32 %s184, 1
      %p188 = scmp.eq.s32.totalorder %s26, 1
      %p189 = scmp.ne.s32.totalorder %s184, %s186
      %p190 = scmp.eq.s32.totalorder %s26, 0
      %p191 = por %p189, %p190
      %p192 = scmp.ne.s32.totalorder %s184, %s186
      %p193 = scmp.eq.s32.totalorder %s31, 1
      %p194 = por %p192, %p193
      %p195 = scmp.ne.s32.totalorder %s186, %s187
      %p196 = scmp.eq.s32.totalorder %s31, 0
      %p197 = por %p195, %p196
      %p198 = scmp.ne.s32.totalorder %s186, %s187
      %p199 = scmp.eq.s32.totalorder %s32, 1
      %p200 = por %p198, %p199
      %p202 = scmp.ne.s32.totalorder %s187, %s201
      %p203 = scmp.eq.s32.totalorder %s32, 0
      %p204 = por %p202, %p203
      %s206 = sadd.s32 %s205, 1
      %p209 = scmp.eq.s32.totalorder %s26, 1
      %p210 = scmp.ne.s32.totalorder %s205, %s207
      %p211 = scmp.eq.s32.totalorder %s26, 0
      %p212 = por %p210, %p211
      %p213 = scmp.ne.s32.totalorder %s205, %s207
      %p214 = scmp.eq.s32.totalorder %s31, 1
      %p215 = por %p213, %p214
      %p216 = scmp.ne.s32.totalorder %s207, %s208
      %p217 = scmp.eq.s32.totalorder %s31, 0
      %p218 = por %p216, %p217
      %p219 = scmp.ne.s32.totalorder %s207, %s208
      %p220 = scmp.eq.s32.totalorder %s32, 1
      %p221 = por %p219, %p220
      %p223 = scmp.ne.s32.totalorder %s208, %s222
      %p224 = scmp.eq.s32.totalorder %s32, 0
      %p225 = por %p223, %p224
      %s227 = sadd.s32 %s226, 1
      %p230 = scmp.eq.s32.totalorder %s26, 1
      %p231 = scmp.ne.s32.totalorder %s226, %s228
      %p232 = scmp.eq.s32.totalorder %s26, 0
      %p233 = por %p231, %p232
      %p234 = scmp.ne.s32.totalorder %s226, %s228
      %p235 = scmp.eq.s32.totalorder %s31, 1
      %p236 = por %p234, %p235
      %p237 = scmp.ne.s32.totalorder %s228, %s229
      %p238 = scmp.eq.s32.totalorder %s31, 0
      %p239 = por %p237, %p238
      %p240 = scmp.ne.s32.totalorder %s228, %s229
      %p241 = scmp.eq.s32.totalorder %s32, 1
      %p242 = por %p240, %p241
      %p244 = scmp.ne.s32.totalorder %s229, %s243
      %p245 = scmp.eq.s32.totalorder %s32, 0
      %p246 = por %p244, %p245
      %s248 = sadd.s32 %s247, 1
      %p251 = scmp.eq.s32.totalorder %s26, 1
      %p252 = scmp.ne.s32.totalorder %s247, %s249
      %p253 = scmp.eq.s32.totalorder %s26, 0
      %p254 = por %p252, %p253
      %p255 = scmp.ne.s32.totalorder %s247, %s249
      %p256 = scmp.eq.s32.totalorder %s31, 1
      %p257 = por %p255, %p256
      %p258 = scmp.ne.s32.totalorder %s249, %s250
      %p259 = scmp.eq.s32.totalorder %s31, 0
      %p260 = por %p258, %p259
      %p261 = scmp.ne.s32.totalorder %s249, %s250
      %p262 = scmp.eq.s32.totalorder %s32, 1
      %p263 = por %p261, %p262
      %p265 = scmp.ne.s32.totalorder %s250, %s264
      %p266 = scmp.eq.s32.totalorder %s32, 0
      %p267 = por %p265, %p266
      %s268 = ssub.s32 %s33, %s45
      %s269 = ssub.s32 %s34, %s41
      %s270 = sor.u32 %s268, %s269
      %p271 = scmp.eq.s32.totalorder %s270, 0
      %s273 = sadd.s32 %s272, 1
      %s274 = scalar_select %p271, %s272, %s273
      %p277 = pneg %p271
      %p278 = scmp.eq.s32.totalorder %s26, 1
      %p279 = por %p277, %p278
      %p280 = scmp.ne.s32.totalorder %s272, %s275
      %p281 = scmp.eq.s32.totalorder %s26, 0
      %p282 = por %p280, %p281
      %p283 = scmp.ne.s32.totalorder %s272, %s275
      %p284 = scmp.eq.s32.totalorder %s31, 1
      %p285 = por %p283, %p284
      %p286 = scmp.ne.s32.totalorder %s275, %s276
      %p287 = scmp.eq.s32.totalorder %s31, 0
      %p288 = por %p286, %p287
      %p289 = scmp.ne.s32.totalorder %s275, %s276
      %p290 = scmp.eq.s32.totalorder %s32, 1
      %p291 = por %p289, %p290
      %p293 = scmp.ne.s32.totalorder %s276, %s292
      %p294 = scmp.eq.s32.totalorder %s32, 0
      %p295 = por %p293, %p294
      %p296 = scmp.le.s32.totalorder 1, %s26
      %p297 = scmp.lt.s32.totalorder %s26, 3
      %p298 = pnand %p296, %p297
      %p299 = pneg %p298
      // Predicated region
      $region9: #{tpu_custom_call.1} parent=5 // pred_check
        _
      $region10: #{tpu_custom_call.1} parent=5 // pred_check_branch
        %301 = sbr.rel (%p298) target = $region12
      $region11: #{tpu_custom_call.1} parent=5 // pred_region
        %s302 = ssub.s32 %s26, 1
        // Predicated region
        $region13: #{tpu_custom_call.1} parent=11 // pred_check
          %p303 = pneg %p113
        $region14: #{tpu_custom_call.1} parent=11 // pred_check_branch
          %305 = sbr.rel (%p303) target = $region16
        $region15: #{tpu_custom_call.1} parent=11 // pred_region
          %307 = vsyncadd [#allocation6], 0
          %s308 = sshll.u32 %s2, 4
          %s309 = int_to_ptr.hbm [resolvable:$true] %s308
          %s310 = sshll.u32 [#allocation7], 4
          %s311 = int_to_ptr.vmem [resolvable:$true] %s310
          %316 = dma.hbm_to_vmem [thread:$0]  %s309, 512, %s311, [#allocation6], 128, 128, 8
        $region16: #{tpu_custom_call.1} parent=11 // pred_fallthru
          _
        // Predicated region
        $region17: #{tpu_custom_call.1} parent=11 // pred_check
          %p317 = pneg %p134
        $region18: #{tpu_custom_call.1} parent=11 // pred_check_branch
          %319 = sbr.rel (%p317) target = $region20
        $region19: #{tpu_custom_call.1} parent=11 // pred_region
          _
        $region20: #{tpu_custom_call.1} parent=11 // pred_fallthru
          _
        // Predicated region
        $region21: #{tpu_custom_call.1} parent=11 // pred_check
          %p320 = pneg %p155
        $region22: #{tpu_custom_call.1} parent=11 // pred_check_branch
          %322 = sbr.rel (%p320) target = $region24
        $region23: #{tpu_custom_call.1} parent=11 // pred_region
          %324 = vsyncadd [#allocation9], 0
          %s325 = sshll.u32 %s4, 4
          %s326 = int_to_ptr.hbm [resolvable:$true] %s325
          %s327 = sshll.u32 [#allocation8], 4
          %s328 = int_to_ptr.vmem [resolvable:$true] %s327
          %333 = dma.hbm_to_vmem [thread:$0]  %s326, 512, %s328, [#allocation9], 128, 128, 8
        $region24: #{tpu_custom_call.1} parent=11 // pred_fallthru
          _
        // Predicated region
        $region25: #{tpu_custom_call.1} parent=11 // pred_check
          %p334 = pneg %p176
        $region26: #{tpu_custom_call.1} parent=11 // pred_check_branch
          %336 = sbr.rel (%p334) target = $region28
        $region27: #{tpu_custom_call.1} parent=11 // pred_region
          _
        $region28: #{tpu_custom_call.1} parent=11 // pred_fallthru
          _
        // Predicated region
        $region29: #{tpu_custom_call.1} parent=11 // pred_check
          %p337 = pneg %p197
        $region30: #{tpu_custom_call.1} parent=11 // pred_check_branch
          %339 = sbr.rel (%p337) target = $region32
        $region31: #{tpu_custom_call.1} parent=11 // pred_region
          %341 = vsyncadd [#allocation9], 0
          %s342 = sshll.u32 %s6, 4
          %s343 = int_to_ptr.hbm [resolvable:$true] %s342
          %s344 = sshll.u32 [#allocation10], 4
          %s345 = int_to_ptr.vmem [resolvable:$true] %s344
          %350 = dma.hbm_to_vmem [thread:$0]  %s343, 512, %s345, [#allocation9], 128, 128, 8
        $region32: #{tpu_custom_call.1} parent=11 // pred_fallthru
          _
        // Predicated region
        $region33: #{tpu_custom_call.1} parent=11 // pred_check
          %p351 = pneg %p218
        $region34: #{tpu_custom_call.1} parent=11 // pred_check_branch
          %353 = sbr.rel (%p351) target = $region36
        $region35: #{tpu_custom_call.1} parent=11 // pred_region
          _
        $region36: #{tpu_custom_call.1} parent=11 // pred_fallthru
          _
        // Predicated region
        $region37: #{tpu_custom_call.1} parent=11 // pred_check
          %p354 = pneg %p239
        $region38: #{tpu_custom_call.1} parent=11 // pred_check_branch
          %356 = sbr.rel (%p354) target = $region40
        $region39: #{tpu_custom_call.1} parent=11 // pred_region
          _
        $region40: #{tpu_custom_call.1} parent=11 // pred_fallthru
          _
        // Predicated region
        $region41: #{tpu_custom_call.1} parent=11 // pred_check
          %p357 = pneg %p260
        $region42: #{tpu_custom_call.1} parent=11 // pred_check_branch
          %359 = sbr.rel (%p357) target = $region44
        $region43: #{tpu_custom_call.1} parent=11 // pred_region
          _
        $region44: #{tpu_custom_call.1} parent=11 // pred_fallthru
          _
      $region12: #{tpu_custom_call.1} parent=5 // pred_fallthru
        _
      %p360 = scmp.lt.s32.totalorder %s26, 2
      // Predicated region
      $region45: #{tpu_custom_call.1} parent=5 // pred_check
        %p361 = pneg %p360
      $region46: #{tpu_custom_call.1} parent=5 // pred_check_branch
        %363 = sbr.rel (%p361) target = $region48
      $region47: #{tpu_custom_call.1} parent=5 // pred_region
        // Predicated region
        $region49: #{tpu_custom_call.1} parent=47 // pred_check
          %p364 = pneg %p60
        $region50: #{tpu_custom_call.1} parent=47 // pred_check_branch
          %366 = sbr.rel (%p364) target = $region52
        $region51: #{tpu_custom_call.1} parent=47 // pred_region
          %s367 = sand.u32 %s50, 1
          %s368 = scalar_lea.sflag [#allocation3], %s367
          %s369 = sand.u32 %s50, 1
          %s370 = smul.addr %s369, 8
          %s371 = scalar_lea.vmem [#allocation2], %s370
          %373 = vsyncadd %s368, 0
          %s374 = sadd.s32 %s34, %s33
          %s375 = smul.addr %s374, 8
          %s376 = scalar_lea.hbm %s0, %s375
          %s378 = sshll.u32 %s376, 4
          %s379 = int_to_ptr.hbm [resolvable:$true] %s378
          %s380 = sshll.u32 %s371, 4
          %s381 = int_to_ptr.vmem [resolvable:$true] %s380
          %383 = dma.hbm_to_vmem [thread:$0]  %s379, 128, %s381, %s368
        $region52: #{tpu_custom_call.1} parent=47 // pred_fallthru
          _
        // Predicated region
        $region53: #{tpu_custom_call.1} parent=47 // pred_check
          %p384 = pneg %p86
        $region54: #{tpu_custom_call.1} parent=47 // pred_check_branch
          %386 = sbr.rel (%p384) target = $region56
        $region55: #{tpu_custom_call.1} parent=47 // pred_region
          %s387 = sand.u32 %s26, 1
          %s388 = scalar_lea.sflag [#allocation6], %s387
          %s389 = sand.u32 %s76, 1
          %s390 = smul.addr %s389, 8
          %s391 = scalar_lea.vmem [#allocation5], %s390
          %393 = vsyncadd %s388, 0
          %s394 = smul.addr %s33, 8
          %s395 = scalar_lea.hbm %s1, %s394
          %s397 = sshll.u32 %s395, 4
          %s398 = int_to_ptr.hbm [resolvable:$true] %s397
          %s399 = sshll.u32 %s391, 4
          %s400 = int_to_ptr.vmem [resolvable:$true] %s399
          %402 = dma.hbm_to_vmem [thread:$0]  %s398, 128, %s400, %s388
        $region56: #{tpu_custom_call.1} parent=47 // pred_fallthru
          _
      $region48: #{tpu_custom_call.1} parent=5 // pred_fallthru
        _
      %p403 = scmp.le.s32.totalorder 1, %s26
      %p404 = scmp.lt.s32.totalorder %s26, 3
      %p405 = pnand %p403, %p404
      %p406 = pneg %p405
      // Predicated region
      $region57: #{tpu_custom_call.1} parent=5 // pred_check
        _
      $region58: #{tpu_custom_call.1} parent=5 // pred_check_branch
        %408 = sbr.rel (%p405) target = $region60
      $region59: #{tpu_custom_call.1} parent=5 // pred_region
        %s409 = ssub.s32 %s26, 1
        %s410 = sand.u32 %s53, 1
        %s411 = scalar_lea.sflag [#allocation3], %s410
        %s412 = sand.u32 %s53, 1
        %s413 = smul.addr %s412, 8
        %s414 = scalar_lea.vmem [#allocation2], %s413
        // Predicated region
        $region61: #{tpu_custom_call.1} parent=59 // pred_check
          %p415 = pneg %p66
        $region62: #{tpu_custom_call.1} parent=59 // pred_check_branch
          %417 = sbr.rel (%p415) target = $region64
        $region63: #{tpu_custom_call.1} parent=59 // pred_region
          %419 = dma.done %s411, 128
        $region64: #{tpu_custom_call.1} parent=59 // pred_fallthru
          _
        %s420 = sand.u32 %s31, 1
        %s421 = scalar_lea.sflag [#allocation6], %s420
        %s422 = sand.u32 %s79, 1
        %s423 = smul.addr %s422, 8
        %s424 = scalar_lea.vmem [#allocation5], %s423
        // Predicated region
        $region65: #{tpu_custom_call.1} parent=59 // pred_check
          %p425 = pneg %p92
        $region66: #{tpu_custom_call.1} parent=59 // pred_check_branch
          %427 = sbr.rel (%p425) target = $region68
        $region67: #{tpu_custom_call.1} parent=59 // pred_region
          %429 = dma.done %s421, 128
        $region68: #{tpu_custom_call.1} parent=59 // pred_fallthru
          _
        // Predicated region
        $region69: #{tpu_custom_call.1} parent=59 // pred_check
          %p430 = pneg %p113
        $region70: #{tpu_custom_call.1} parent=59 // pred_check_branch
          %432 = sbr.rel (%p430) target = $region72
        $region71: #{tpu_custom_call.1} parent=59 // pred_region
          %434 = dma.done [#allocation6], 512
        $region72: #{tpu_custom_call.1} parent=59 // pred_fallthru
          _
        // Predicated region
        $region73: #{tpu_custom_call.1} parent=59 // pred_check
          %p435 = pneg %p155
        $region74: #{tpu_custom_call.1} parent=59 // pred_check_branch
          %437 = sbr.rel (%p435) target = $region76
        $region75: #{tpu_custom_call.1} parent=59 // pred_region
          %439 = dma.done [#allocation9], 512
        $region76: #{tpu_custom_call.1} parent=59 // pred_fallthru
          _
        // Predicated region
        $region77: #{tpu_custom_call.1} parent=59 // pred_check
          %p440 = pneg %p197
        $region78: #{tpu_custom_call.1} parent=59 // pred_check_branch
          %442 = sbr.rel (%p440) target = $region80
        $region79: #{tpu_custom_call.1} parent=59 // pred_region
          %444 = dma.done [#allocation9], 512
        $region80: #{tpu_custom_call.1} parent=59 // pred_fallthru
          _
        %s445 = sand.u32 %s53, 1
        %s446 = scalar_lea.sflag [#allocation3], %s445
        %s447 = sand.u32 %s53, 1
        %s448 = smul.addr %s447, 8
        %s449 = scalar_lea.vmem [#allocation2], %s448
        %p450 = pneg %p66
        %p451 = pneg %p63
        %s452 = sand.u32 %s31, 1
        %s453 = scalar_lea.sflag [#allocation6], %s452
        %s454 = sand.u32 %s79, 1
        %s455 = smul.addr %s454, 8
        %s456 = scalar_lea.vmem [#allocation5], %s455
        %p457 = pneg %p92
        %p458 = pneg %p89
        %p459 = pneg %p113
        %p460 = pneg %p110
        %p461 = pneg %p134
        %p462 = pneg %p131
        %p463 = pneg %p155
        %p464 = pneg %p152
        %p465 = pneg %p176
        %p466 = pneg %p173
        %p467 = pneg %p197
        %p468 = pneg %p194
        %p469 = pneg %p218
        %p470 = pneg %p215
        %p471 = pneg %p239
        %p472 = pneg %p236
        %p473 = pneg %p260
        %p474 = pneg %p257
        %p475 = pneg %p288
        %p476 = pneg %p285
        %s477 = sand.u32 %s275, 1
        %s478 = scalar_lea.sflag [#allocation4], %s477
        %s479 = sand.u32 %s275, 1
        %s480 = smul.addr %s479, 8
        %s481 = scalar_lea.vmem [#allocation11], %s480
        %v482 = vld [vmem:[%s414] sm:$0xff]
        %v483 = vld [vmem:[%s424] sm:$0xff]
        %v484 = vld [vmem:[%s3] sm:$0x1]
        %v485 = vld [vmem:[%s5] sm:$0x1]
        %v486 = vld [vmem:[%s7] sm:$0x1]
        %v487 = vld [vmem:[%s8] sm:$0x1]
        %v488 = vld [vmem:[%s9] sm:$0x1]
        %v489 = vld [vmem:[#allocation7] sm:$0xff]
        %v490 = vld [vmem:[#allocation7 + $0x8] sm:$0xff]
        %v491 = vld [vmem:[#allocation7 + $0x10] sm:$0xff]
        %v492 = vld [vmem:[#allocation7 + $0x18] sm:$0xff]
        %v493 = vld [vmem:[#allocation8] sm:$0xff]
        %v494 = vld [vmem:[#allocation8 + $0x8] sm:$0xff]
        %v495 = vld [vmem:[#allocation8 + $0x10] sm:$0xff]
        %v496 = vld [vmem:[#allocation8 + $0x18] sm:$0xff]
        %v497 = vld [vmem:[#allocation10] sm:$0xff]
        %v498 = vld [vmem:[#allocation10 + $0x8] sm:$0xff]
        %v499 = vld [vmem:[#allocation10 + $0x10] sm:$0xff]
        %v500 = vld [vmem:[#allocation10 + $0x18] sm:$0xff]
        %v502 = vperm.slane %v484, 0
        %vm504 = vcmask 261120
        %v506 = vsel %vm504, %v482, 0
        %508 = vmatpush.msra.mxu0 0.0
        %509 = vmatpush.msra.mxu0 0.0
        %510 = vmatpush.msra.mxu0 0.0
        %511 = vmatpush.msra.mxu0 0.0
        %512 = vmatpush.msra.mxu0 0.0
        %513 = vmatpush.msra.mxu0 0.0
        %514 = vmatpush.msra.mxu0 0.0
        %515 = vmatpush.msra.mxu0 0.0
        %516 = vmatpush.msra.mxu0 0.0
        %517 = vmatpush.msra.mxu0 0.0
        %518 = vmatpush.msra.mxu0 0.0
        %519 = vmatpush.msra.mxu0 0.0
        %520 = vmatpush.msra.mxu0 %v492
        %521 = vmatpush.msra.mxu0 %v491
        %522 = vmatpush.msra.mxu0 %v490
        %523 = vmatpush.msra.mxu0 %v489
        %524 = vmatmul.f32.gmra.mxu0 %v506
        %v525 = vpop.f32.mrf.mxu0
        %v526 = vadd.f32 %v502, %v525
        %527 = vdwg.mxu0
        %v528 = vmul.f32 %v526, 0.35355338
        %v530 = vperm.slane %v485, 0
        %v533 = vsel %vm504, %v483, 0
        %535 = vmatpush.msra.mxu0 0.0
        %536 = vmatpush.msra.mxu0 0.0
        %537 = vmatpush.msra.mxu0 0.0
        %538 = vmatpush.msra.mxu0 0.0
        %539 = vmatpush.msra.mxu0 0.0
        %540 = vmatpush.msra.mxu0 0.0
        %541 = vmatpush.msra.mxu0 0.0
        %542 = vmatpush.msra.mxu0 0.0
        %543 = vmatpush.msra.mxu0 0.0
        %544 = vmatpush.msra.mxu0 0.0
        %545 = vmatpush.msra.mxu0 0.0
        %546 = vmatpush.msra.mxu0 0.0
        %547 = vmatpush.msra.mxu0 %v496
        %548 = vmatpush.msra.mxu0 %v495
        %549 = vmatpush.msra.mxu0 %v494
        %550 = vmatpush.msra.mxu0 %v493
        %551 = vmatmul.f32.gmra.mxu0 %v533
        %v552 = vpop.f32.mrf.mxu0
        %v553 = vadd.f32 %v530, %v552
        %554 = vdwg.mxu0
        %556 = vrot.lane.b32.xlu0 %v528, 120
        %v557 = vpop.permute.xlu0 %556
        %559 = vrot.lane.b32.xlu0 %v528, 112
        %v560 = vpop.permute.xlu0 %559
        %562 = vrot.lane.b32.xlu0 %v528, 104
        %v563 = vpop.permute.xlu0 %562
        %v565 = vrot.slane %v560, 4
        %vm566 = vcmask 1047556
        %v567 = vsel %vm566, %v565, %v528
        %v568 = vrot.slane %v528, 4
        %v569 = vsel %vm566, %v560, %v568
        %v571 = vunpack.c.l.s4 1983009808
        %v572 = vunpack.c.0.s8 %v571
        %v573 = vperm.slane %v567, %v572
        %v575 = vunpack.c.l.s4 1983009808
        %v576 = vunpack.c.0.s8 %v575
        %v577 = vperm.slane %v569, %v576
        %v578 = vrot.slane %v563, 4
        %v579 = vsel %vm566, %v578, %v557
        %v580 = vrot.slane %v557, 4
        %v581 = vsel %vm566, %v563, %v580
        %v583 = vunpack.c.l.s4 1983009808
        %v584 = vunpack.c.0.s8 %v583
        %v585 = vperm.slane %v579, %v584
        %v587 = vunpack.c.l.s4 1983009808
        %v588 = vunpack.c.0.s8 %v587
        %v589 = vperm.slane %v581, %v588
        %v590 = vrot.slane %v585, 4
        %v591 = vsel %vm566, %v590, %v573
        %v592 = vrot.slane %v573, 4
        %v593 = vsel %vm566, %v585, %v592
        %v595 = vunpack.c.l.s4 1934713408
        %v596 = vunpack.c.0.s8 %v595
        %v597 = vperm.slane %v591, %v596
        %v599 = vunpack.c.l.s4 1934713408
        %v600 = vunpack.c.0.s8 %v599
        %v601 = vperm.slane %v593, %v600
        %v602 = vrot.slane %v589, 4
        %v603 = vsel %vm566, %v602, %v577
        %v604 = vrot.slane %v577, 4
        %v605 = vsel %vm566, %v589, %v604
        %v607 = vunpack.c.l.s4 1934713408
        %v608 = vunpack.c.0.s8 %v607
        %v609 = vperm.slane %v603, %v608
        %v611 = vunpack.c.l.s4 1934713408
        %v612 = vunpack.c.0.s8 %v611
        %v613 = vperm.slane %v605, %v612
        %v614 = vrot.slane %v597, 4
        %v615 = vsel %vm566, 0.0, %v614
        %v616 = vrot.slane %v601, 4
        %v617 = vsel %vm566, 0.0, %v616
        %v618 = vrot.slane %v609, 4
        %v619 = vsel %vm566, 0.0, %v618
        %v620 = vrot.slane %v613, 4
        %v621 = vsel %vm566, 0.0, %v620
        %v622 = vsel %vm566, %v616, %v597
        %v624 = vunpack.c.l.s4 1983009808
        %v625 = vunpack.c.0.s8 %v624
        %v626 = vperm.slane %v622, %v625
        %v627 = vrot.slane %v617, 4
        %v628 = vsel %vm566, %v627, %v615
        %v630 = vunpack.c.l.s4 1983009808
        %v631 = vunpack.c.0.s8 %v630
        %v632 = vperm.slane %v628, %v631
        %v633 = vsel %vm566, %v620, %v609
        %v635 = vunpack.c.l.s4 1983009808
        %v636 = vunpack.c.0.s8 %v635
        %v637 = vperm.slane %v633, %v636
        %v638 = vrot.slane %v621, 4
        %v639 = vsel %vm566, %v638, %v619
        %v641 = vunpack.c.l.s4 1983009808
        %v642 = vunpack.c.0.s8 %v641
        %v643 = vperm.slane %v639, %v642
        %v644 = vrot.slane %v632, 4
        %v645 = vsel %vm566, %v644, %v626
        %v646 = vrot.slane %v626, 4
        %v647 = vsel %vm566, %v632, %v646
        %v649 = vunpack.c.l.s4 1934713408
        %v650 = vunpack.c.0.s8 %v649
        %v651 = vperm.slane %v645, %v650
        %v653 = vunpack.c.l.s4 1934713408
        %v654 = vunpack.c.0.s8 %v653
        %v655 = vperm.slane %v647, %v654
        %v656 = vrot.slane %v643, 4
        %v657 = vsel %vm566, %v656, %v637
        %v658 = vrot.slane %v637, 4
        %v659 = vsel %vm566, %v643, %v658
        %v661 = vunpack.c.l.s4 1934713408
        %v662 = vunpack.c.0.s8 %v661
        %v663 = vperm.slane %v657, %v662
        %v665 = vunpack.c.l.s4 1934713408
        %v666 = vunpack.c.0.s8 %v665
        %v667 = vperm.slane %v659, %v666
        %v668 = vrot.slane %v663, 4
        %v669 = vsel %vm566, %v668, %v651
        %v670 = vrot.slane %v651, 4
        %v671 = vsel %vm566, %v663, %v670
        %v672 = vrot.slane %v667, 4
        %v673 = vsel %vm566, %v672, %v655
        %v674 = vrot.slane %v655, 4
        %v675 = vsel %vm566, %v667, %v674
        %677 = vrot.lane.b32.xlu0 %v553, 120
        %v678 = vpop.permute.xlu0 %677
        %680 = vrot.lane.b32.xlu0 %v553, 112
        %v681 = vpop.permute.xlu0 %680
        %683 = vrot.lane.b32.xlu0 %v553, 104
        %v684 = vpop.permute.xlu0 %683
        %v686 = vrot.slane %v681, 4
        %v687 = vsel %vm566, %v686, %v553
        %v688 = vrot.slane %v553, 4
        %v689 = vsel %vm566, %v681, %v688
        %v691 = vunpack.c.l.s4 1983009808
        %v692 = vunpack.c.0.s8 %v691
        %v693 = vperm.slane %v687, %v692
        %v695 = vunpack.c.l.s4 1983009808
        %v696 = vunpack.c.0.s8 %v695
        %v697 = vperm.slane %v689, %v696
        %v698 = vrot.slane %v684, 4
        %v699 = vsel %vm566, %v698, %v678
        %v700 = vrot.slane %v678, 4
        %v701 = vsel %vm566, %v684, %v700
        %v703 = vunpack.c.l.s4 1983009808
        %v704 = vunpack.c.0.s8 %v703
        %v705 = vperm.slane %v699, %v704
        %v707 = vunpack.c.l.s4 1983009808
        %v708 = vunpack.c.0.s8 %v707
        %v709 = vperm.slane %v701, %v708
        %v710 = vrot.slane %v705, 4
        %v711 = vsel %vm566, %v710, %v693
        %v712 = vrot.slane %v693, 4
        %v713 = vsel %vm566, %v705, %v712
        %v715 = vunpack.c.l.s4 1934713408
        %v716 = vunpack.c.0.s8 %v715
        %v717 = vperm.slane %v711, %v716
        %v719 = vunpack.c.l.s4 1934713408
        %v720 = vunpack.c.0.s8 %v719
        %v721 = vperm.slane %v713, %v720
        %v722 = vrot.slane %v709, 4
        %v723 = vsel %vm566, %v722, %v697
        %v724 = vrot.slane %v697, 4
        %v725 = vsel %vm566, %v709, %v724
        %v727 = vunpack.c.l.s4 1934713408
        %v728 = vunpack.c.0.s8 %v727
        %v729 = vperm.slane %v723, %v728
        %v731 = vunpack.c.l.s4 1934713408
        %v732 = vunpack.c.0.s8 %v731
        %v733 = vperm.slane %v725, %v732
        %v734 = vrot.slane %v717, 4
        %v735 = vsel %vm566, 0.0, %v734
        %v736 = vrot.slane %v721, 4
        %v737 = vsel %vm566, 0.0, %v736
        %v738 = vrot.slane %v729, 4
        %v739 = vsel %vm566, 0.0, %v738
        %v740 = vrot.slane %v733, 4
        %v741 = vsel %vm566, 0.0, %v740
        %v742 = vsel %vm566, %v736, %v717
        %v744 = vunpack.c.l.s4 1983009808
        %v745 = vunpack.c.0.s8 %v744
        %v746 = vperm.slane %v742, %v745
        %v747 = vrot.slane %v737, 4
        %v748 = vsel %vm566, %v747, %v735
        %v750 = vunpack.c.l.s4 1983009808
        %v751 = vunpack.c.0.s8 %v750
        %v752 = vperm.slane %v748, %v751
        %v753 = vsel %vm566, %v740, %v729
        %v755 = vunpack.c.l.s4 1983009808
        %v756 = vunpack.c.0.s8 %v755
        %v757 = vperm.slane %v753, %v756
        %v758 = vrot.slane %v741, 4
        %v759 = vsel %vm566, %v758, %v739
        %v761 = vunpack.c.l.s4 1983009808
        %v762 = vunpack.c.0.s8 %v761
        %v763 = vperm.slane %v759, %v762
        %v764 = vrot.slane %v752, 4
        %v765 = vsel %vm566, %v764, %v746
        %v766 = vrot.slane %v746, 4
        %v767 = vsel %vm566, %v752, %v766
        %v769 = vunpack.c.l.s4 1934713408
        %v770 = vunpack.c.0.s8 %v769
        %v771 = vperm.slane %v765, %v770
        %v773 = vunpack.c.l.s4 1934713408
        %v774 = vunpack.c.0.s8 %v773
        %v775 = vperm.slane %v767, %v774
        %v776 = vrot.slane %v763, 4
        %v777 = vsel %vm566, %v776, %v757
        %v778 = vrot.slane %v757, 4
        %v779 = vsel %vm566, %v763, %v778
        %v781 = vunpack.c.l.s4 1934713408
        %v782 = vunpack.c.0.s8 %v781
        %v783 = vperm.slane %v777, %v782
        %v785 = vunpack.c.l.s4 1934713408
        %v786 = vunpack.c.0.s8 %v785
        %v787 = vperm.slane %v779, %v786
        %v788 = vrot.slane %v783, 4
        %v789 = vsel %vm566, %v788, %v771
        %v790 = vrot.slane %v771, 4
        %v791 = vsel %vm566, %v783, %v790
        %v792 = vrot.slane %v787, 4
        %v793 = vsel %vm566, %v792, %v775
        %v794 = vrot.slane %v775, 4
        %v795 = vsel %vm566, %v787, %v794
        %vm796 = vcmask 64512
        %v798 = vsel %vm796, %v669, 0
        %v801 = vsel %vm796, %v789, 0
        %803 = vmatpush.xpose.msra.mxu0 0.0
        %804 = vmatpush.xpose.msra.mxu0 0.0
        %805 = vmatpush.xpose.msra.mxu0 0.0
        %806 = vmatpush.xpose.msra.mxu0 0.0
        %807 = vmatpush.xpose.msra.mxu0 0.0
        %808 = vmatpush.xpose.msra.mxu0 0.0
        %809 = vmatpush.xpose.msra.mxu0 0.0
        %810 = vmatpush.xpose.msra.mxu0 0.0
        %811 = vmatpush.xpose.msra.mxu0 0.0
        %812 = vmatpush.xpose.msra.mxu0 0.0
        %813 = vmatpush.xpose.msra.mxu0 0.0
        %814 = vmatpush.xpose.msra.mxu0 0.0
        %815 = vmatpush.xpose.msra.mxu0 0.0
        %816 = vmatpush.xpose.msra.mxu0 0.0
        %817 = vmatpush.xpose.msra.mxu0 0.0
        %818 = vmatpush.xpose.msra.mxu0 %v801
        %819 = vmatmul.f32.gmra.mxu0 %v798
        %v820 = vpop.f32.mrf.mxu0
        %v821 = vadd.f32 0.0, %v820
        %822 = vdwg.mxu0
        %v824 = vsel %vm796, %v671, 0
        %v827 = vsel %vm796, %v791, 0
        %829 = vmatpush.xpose.msra.mxu0 0.0
        %830 = vmatpush.xpose.msra.mxu0 0.0
        %831 = vmatpush.xpose.msra.mxu0 0.0
        %832 = vmatpush.xpose.msra.mxu0 0.0
        %833 = vmatpush.xpose.msra.mxu0 0.0
        %834 = vmatpush.xpose.msra.mxu0 0.0
        %835 = vmatpush.xpose.msra.mxu0 0.0
        %836 = vmatpush.xpose.msra.mxu0 0.0
        %837 = vmatpush.xpose.msra.mxu0 0.0
        %838 = vmatpush.xpose.msra.mxu0 0.0
        %839 = vmatpush.xpose.msra.mxu0 0.0
        %840 = vmatpush.xpose.msra.mxu0 0.0
        %841 = vmatpush.xpose.msra.mxu0 0.0
        %842 = vmatpush.xpose.msra.mxu0 0.0
        %843 = vmatpush.xpose.msra.mxu0 0.0
        %844 = vmatpush.xpose.msra.mxu0 %v827
        %845 = vmatmul.f32.gmra.mxu0 %v824
        %v846 = vpop.f32.mrf.mxu0
        %v847 = vadd.f32 0.0, %v846
        %848 = vdwg.mxu0
        %v850 = vsel %vm796, %v673, 0
        %v853 = vsel %vm796, %v793, 0
        %855 = vmatpush.xpose.msra.mxu0 0.0
        %856 = vmatpush.xpose.msra.mxu0 0.0
        %857 = vmatpush.xpose.msra.mxu0 0.0
        %858 = vmatpush.xpose.msra.mxu0 0.0
        %859 = vmatpush.xpose.msra.mxu0 0.0
        %860 = vmatpush.xpose.msra.mxu0 0.0
        %861 = vmatpush.xpose.msra.mxu0 0.0
        %862 = vmatpush.xpose.msra.mxu0 0.0
        %863 = vmatpush.xpose.msra.mxu0 0.0
        %864 = vmatpush.xpose.msra.mxu0 0.0
        %865 = vmatpush.xpose.msra.mxu0 0.0
        %866 = vmatpush.xpose.msra.mxu0 0.0
        %867 = vmatpush.xpose.msra.mxu0 0.0
        %868 = vmatpush.xpose.msra.mxu0 0.0
        %869 = vmatpush.xpose.msra.mxu0 0.0
        %870 = vmatpush.xpose.msra.mxu0 %v853
        %871 = vmatmul.f32.gmra.mxu0 %v850
        %v872 = vpop.f32.mrf.mxu0
        %v873 = vadd.f32 0.0, %v872
        %874 = vdwg.mxu0
        %v876 = vsel %vm796, %v675, 0
        %v879 = vsel %vm796, %v795, 0
        %881 = vmatpush.xpose.msra.mxu0 0.0
        %882 = vmatpush.xpose.msra.mxu0 0.0
        %883 = vmatpush.xpose.msra.mxu0 0.0
        %884 = vmatpush.xpose.msra.mxu0 0.0
        %885 = vmatpush.xpose.msra.mxu0 0.0
        %886 = vmatpush.xpose.msra.mxu0 0.0
        %887 = vmatpush.xpose.msra.mxu0 0.0
        %888 = vmatpush.xpose.msra.mxu0 0.0
        %889 = vmatpush.xpose.msra.mxu0 0.0
        %890 = vmatpush.xpose.msra.mxu0 0.0
        %891 = vmatpush.xpose.msra.mxu0 0.0
        %892 = vmatpush.xpose.msra.mxu0 0.0
        %893 = vmatpush.xpose.msra.mxu0 0.0
        %894 = vmatpush.xpose.msra.mxu0 0.0
        %895 = vmatpush.xpose.msra.mxu0 0.0
        %896 = vmatpush.xpose.msra.mxu0 %v879
        %897 = vmatmul.f32.gmra.mxu0 %v876
        %v898 = vpop.f32.mrf.mxu0
        %v899 = vadd.f32 0.0, %v898
        %900 = vdwg.mxu0
        %v901 = vsel %vm796, %v821, -inf
        %902 = vmax.xlane.f32.xlu0 %v901
        %v903 = vpop.xlane.xlu0 %902
        %v904 = vsel %vm796, %v847, -inf
        %905 = vmax.xlane.f32.xlu0 %v904
        %v906 = vpop.xlane.xlu0 %905
        %v907 = vsel %vm796, %v873, -inf
        %908 = vmax.xlane.f32.xlu0 %v907
        %v909 = vpop.xlane.xlu0 %908
        %v910 = vsel %vm796, %v899, -inf
        %911 = vmax.xlane.f32.xlu0 %v910
        %v912 = vpop.xlane.xlu0 %911
        %v913 = vsub.f32 %v821, %v903
        %v914 = vsub.f32 %v847, %v906
        %v915 = vsub.f32 %v873, %v909
        %v916 = vsub.f32 %v899, %v912
        %v917 = vmul.f32 %v913, 1.442695
        %v918 = vpow.pop %v917
        %v919 = vmul.f32 %v914, 1.442695
        %v920 = vpow.pop %v919
        %v921 = vmul.f32 %v915, 1.442695
        %v922 = vpow.pop %v921
        %v923 = vmul.f32 %v916, 1.442695
        %v924 = vpow.pop %v923
        %v925 = vsel %vm796, %v918, 0.0
        %926 = vadd.xlane.f32.xlu0 %v925
        %v927 = vpop.xlane.xlu0 %926
        %v928 = vsel %vm796, %v920, 0.0
        %929 = vadd.xlane.f32.xlu0 %v928
        %v930 = vpop.xlane.xlu0 %929
        %v931 = vsel %vm796, %v922, 0.0
        %932 = vadd.xlane.f32.xlu0 %v931
        %v933 = vpop.xlane.xlu0 %932
        %v934 = vsel %vm796, %v924, 0.0
        %935 = vadd.xlane.f32.xlu0 %v934
        %v936 = vpop.xlane.xlu0 %935
        %v937 = vrcp.pop %v927
        %v938 = vrcp.pop %v930
        %v939 = vrcp.pop %v933
        %v940 = vrcp.pop %v936
        %v941 = vmul.f32 %v918, %v937
        %v942 = vmul.f32 %v920, %v938
        %v943 = vmul.f32 %v922, %v939
        %v944 = vmul.f32 %v924, %v940
        %v946 = vsel %vm796, %v941, 0
        %948 = vmatpush.msra.mxu0 0.0
        %949 = vmatpush.msra.mxu0 0.0
        %950 = vmatpush.msra.mxu0 0.0
        %951 = vmatpush.msra.mxu0 0.0
        %952 = vmatpush.msra.mxu0 0.0
        %953 = vmatpush.msra.mxu0 0.0
        %954 = vmatpush.msra.mxu0 0.0
        %955 = vmatpush.msra.mxu0 0.0
        %956 = vmatpush.msra.mxu0 0.0
        %957 = vmatpush.msra.mxu0 0.0
        %958 = vmatpush.msra.mxu0 0.0
        %959 = vmatpush.msra.mxu0 0.0
        %960 = vmatpush.msra.mxu0 0.0
        %961 = vmatpush.msra.mxu0 0.0
        %962 = vmatpush.msra.mxu0 0.0
        %963 = vmatpush.msra.mxu0 %v789
        %964 = vmatmul.f32.gmra.mxu0 %v946
        %v965 = vpop.f32.mrf.mxu0
        %v966 = vadd.f32 0.0, %v965
        %967 = vdwg.mxu0
        %v969 = vsel %vm796, %v942, 0
        %971 = vmatpush.msra.mxu0 0.0
        %972 = vmatpush.msra.mxu0 0.0
        %973 = vmatpush.msra.mxu0 0.0
        %974 = vmatpush.msra.mxu0 0.0
        %975 = vmatpush.msra.mxu0 0.0
        %976 = vmatpush.msra.mxu0 0.0
        %977 = vmatpush.msra.mxu0 0.0
        %978 = vmatpush.msra.mxu0 0.0
        %979 = vmatpush.msra.mxu0 0.0
        %980 = vmatpush.msra.mxu0 0.0
        %981 = vmatpush.msra.mxu0 0.0
        %982 = vmatpush.msra.mxu0 0.0
        %983 = vmatpush.msra.mxu0 0.0
        %984 = vmatpush.msra.mxu0 0.0
        %985 = vmatpush.msra.mxu0 0.0
        %986 = vmatpush.msra.mxu0 %v791
        %987 = vmatmul.f32.gmra.mxu0 %v969
        %v988 = vpop.f32.mrf.mxu0
        %v989 = vadd.f32 0.0, %v988
        %990 = vdwg.mxu0
        %v992 = vsel %vm796, %v943, 0
        %994 = vmatpush.msra.mxu0 0.0
        %995 = vmatpush.msra.mxu0 0.0
        %996 = vmatpush.msra.mxu0 0.0
        %997 = vmatpush.msra.mxu0 0.0
        %998 = vmatpush.msra.mxu0 0.0
        %999 = vmatpush.msra.mxu0 0.0
        %1000 = vmatpush.msra.mxu0 0.0
        %1001 = vmatpush.msra.mxu0 0.0
        %1002 = vmatpush.msra.mxu0 0.0
        %1003 = vmatpush.msra.mxu0 0.0
        %1004 = vmatpush.msra.mxu0 0.0
        %1005 = vmatpush.msra.mxu0 0.0
        %1006 = vmatpush.msra.mxu0 0.0
        %1007 = vmatpush.msra.mxu0 0.0
        %1008 = vmatpush.msra.mxu0 0.0
        %1009 = vmatpush.msra.mxu0 %v793
        %1010 = vmatmul.f32.gmra.mxu0 %v992
        %v1011 = vpop.f32.mrf.mxu0
        %v1012 = vadd.f32 0.0, %v1011
        %1013 = vdwg.mxu0
        %v1015 = vsel %vm796, %v944, 0
        %1017 = vmatpush.msra.mxu0 0.0
        %1018 = vmatpush.msra.mxu0 0.0
        %1019 = vmatpush.msra.mxu0 0.0
        %1020 = vmatpush.msra.mxu0 0.0
        %1021 = vmatpush.msra.mxu0 0.0
        %1022 = vmatpush.msra.mxu0 0.0
        %1023 = vmatpush.msra.mxu0 0.0
        %1024 = vmatpush.msra.mxu0 0.0
        %1025 = vmatpush.msra.mxu0 0.0
        %1026 = vmatpush.msra.mxu0 0.0
        %1027 = vmatpush.msra.mxu0 0.0
        %1028 = vmatpush.msra.mxu0 0.0
        %1029 = vmatpush.msra.mxu0 0.0
        %1030 = vmatpush.msra.mxu0 0.0
        %1031 = vmatpush.msra.mxu0 0.0
        %1032 = vmatpush.msra.mxu0 %v795
        %1033 = vmatmul.f32.gmra.mxu0 %v1015
        %v1034 = vpop.f32.mrf.mxu0
        %v1035 = vadd.f32 0.0, %v1034
        %1036 = vdwg.mxu0
        %v1037 = vrot.slane %v1012, 4
        %v1038 = vsel %vm566, %v1037, %v966
        %v1039 = vrot.slane %v966, 4
        %v1040 = vsel %vm566, %v1012, %v1039
        %v1042 = vunpack.c.l.s4 1983009808
        %v1043 = vunpack.c.0.s8 %v1042
        %v1044 = vperm.slane %v1038, %v1043
        %v1046 = vunpack.c.l.s4 1983009808
        %v1047 = vunpack.c.0.s8 %v1046
        %v1048 = vperm.slane %v1040, %v1047
        %v1049 = vrot.slane %v1035, 4
        %v1050 = vsel %vm566, %v1049, %v989
        %v1051 = vrot.slane %v989, 4
        %v1052 = vsel %vm566, %v1035, %v1051
        %v1054 = vunpack.c.l.s4 1983009808
        %v1055 = vunpack.c.0.s8 %v1054
        %v1056 = vperm.slane %v1050, %v1055
        %v1058 = vunpack.c.l.s4 1983009808
        %v1059 = vunpack.c.0.s8 %v1058
        %v1060 = vperm.slane %v1052, %v1059
        %v1061 = vrot.slane %v1056, 4
        %v1062 = vsel %vm566, %v1061, %v1044
        %v1063 = vrot.slane %v1044, 4
        %v1064 = vsel %vm566, %v1056, %v1063
        %v1066 = vunpack.c.l.s4 1934713408
        %v1067 = vunpack.c.0.s8 %v1066
        %v1068 = vperm.slane %v1062, %v1067
        %v1070 = vunpack.c.l.s4 1934713408
        %v1071 = vunpack.c.0.s8 %v1070
        %v1072 = vperm.slane %v1064, %v1071
        %v1073 = vrot.slane %v1060, 4
        %v1074 = vsel %vm566, %v1073, %v1048
        %v1075 = vrot.slane %v1048, 4
        %v1076 = vsel %vm566, %v1060, %v1075
        %v1078 = vunpack.c.l.s4 1934713408
        %v1079 = vunpack.c.0.s8 %v1078
        %v1080 = vperm.slane %v1074, %v1079
        %v1082 = vunpack.c.l.s4 1934713408
        %v1083 = vunpack.c.0.s8 %v1082
        %v1084 = vperm.slane %v1076, %v1083
        %v1085 = vrot.slane %v1068, 4
        %v1086 = vsel %vm566, 0.0, %v1085
        %v1087 = vrot.slane %v1072, 4
        %v1088 = vsel %vm566, 0.0, %v1087
        %v1089 = vrot.slane %v1080, 4
        %v1090 = vsel %vm566, 0.0, %v1089
        %v1091 = vrot.slane %v1084, 4
        %v1092 = vsel %vm566, 0.0, %v1091
        %v1093 = vsel %vm566, %v1087, %v1068
        %v1095 = vunpack.c.l.s4 1983009808
        %v1096 = vunpack.c.0.s8 %v1095
        %v1097 = vperm.slane %v1093, %v1096
        %v1098 = vrot.slane %v1088, 4
        %v1099 = vsel %vm566, %v1098, %v1086
        %v1101 = vunpack.c.l.s4 1983009808
        %v1102 = vunpack.c.0.s8 %v1101
        %v1103 = vperm.slane %v1099, %v1102
        %v1104 = vsel %vm566, %v1091, %v1080
        %v1106 = vunpack.c.l.s4 1983009808
        %v1107 = vunpack.c.0.s8 %v1106
        %v1108 = vperm.slane %v1104, %v1107
        %v1109 = vrot.slane %v1092, 4
        %v1110 = vsel %vm566, %v1109, %v1090
        %v1112 = vunpack.c.l.s4 1983009808
        %v1113 = vunpack.c.0.s8 %v1112
        %v1114 = vperm.slane %v1110, %v1113
        %v1115 = vrot.slane %v1103, 4
        %v1116 = vsel %vm566, %v1115, %v1097
        %v1117 = vrot.slane %v1097, 4
        %v1118 = vsel %vm566, %v1103, %v1117
        %v1120 = vunpack.c.l.s4 1934713408
        %v1121 = vunpack.c.0.s8 %v1120
        %v1122 = vperm.slane %v1116, %v1121
        %v1124 = vunpack.c.l.s4 1934713408
        %v1125 = vunpack.c.0.s8 %v1124
        %v1126 = vperm.slane %v1118, %v1125
        %v1127 = vrot.slane %v1114, 4
        %v1128 = vsel %vm566, %v1127, %v1108
        %v1129 = vrot.slane %v1108, 4
        %v1130 = vsel %vm566, %v1114, %v1129
        %v1132 = vunpack.c.l.s4 1934713408
        %v1133 = vunpack.c.0.s8 %v1132
        %v1134 = vperm.slane %v1128, %v1133
        %v1136 = vunpack.c.l.s4 1934713408
        %v1137 = vunpack.c.0.s8 %v1136
        %v1138 = vperm.slane %v1130, %v1137
        %v1139 = vrot.slane %v1134, 4
        %v1140 = vsel %vm566, %v1139, %v1122
        %v1141 = vrot.slane %v1122, 4
        %v1142 = vsel %vm566, %v1134, %v1141
        %v1143 = vrot.slane %v1138, 4
        %v1144 = vsel %vm566, %v1143, %v1126
        %v1145 = vrot.slane %v1126, 4
        %v1146 = vsel %vm566, %v1138, %v1145
        %1148 = vrot.lane.b32.xlu0 %v1142, 8
        %v1149 = vpop.permute.xlu0 %1148
        %1152 = vrot.lane.b32.xlu0 %v1144, 16
        %v1153 = vpop.permute.xlu0 %1152
        %1156 = vrot.lane.b32.xlu0 %v1146, 24
        %v1157 = vpop.permute.xlu0 %1156
        %v1159 = vsel %vm796, %v1140, %v1149
        %vm1160 = vcmask 130048
        %v1161 = vsel %vm1160, %v1159, %v1153
        %vm1162 = vcmask 195584
        %v1163 = vsel %vm1162, %v1161, %v1157
        %v1165 = vperm.slane %v486, 0
        %v1168 = vsel %vm504, %v1163, 0
        %1170 = vmatpush.msra.mxu0 0.0
        %1171 = vmatpush.msra.mxu0 0.0
        %1172 = vmatpush.msra.mxu0 0.0
        %1173 = vmatpush.msra.mxu0 0.0
        %1174 = vmatpush.msra.mxu0 0.0
        %1175 = vmatpush.msra.mxu0 0.0
        %1176 = vmatpush.msra.mxu0 0.0
        %1177 = vmatpush.msra.mxu0 0.0
        %1178 = vmatpush.msra.mxu0 0.0
        %1179 = vmatpush.msra.mxu0 0.0
        %1180 = vmatpush.msra.mxu0 0.0
        %1181 = vmatpush.msra.mxu0 0.0
        %1182 = vmatpush.msra.mxu0 %v500
        %1183 = vmatpush.msra.mxu0 %v499
        %1184 = vmatpush.msra.mxu0 %v498
        %1185 = vmatpush.msra.mxu0 %v497
        %1186 = vmatmul.f32.gmra.mxu0 %v1168
        %v1187 = vpop.f32.mrf.mxu0
        %v1188 = vadd.f32 %v1165, %v1187
        %1189 = vdwg.mxu0
        %v1190 = vadd.f32 %v1188, %v482
        %v1191 = vsel %vm504, %v1190, 0.0
        %1192 = vadd.xlane.f32.xlu0 %v1191
        %v1193 = vpop.xlane.xlu0 %1192
        %v1194 = vrcp.pop 32.0
        %v1195 = vmul.f32 32.0, %v1194
        %v1196 = vsub.f32 1.0, %v1195
        %v1197 = vmul.f32 %v1194, %v1196
        %v1198 = vadd.f32 %v1194, %v1197
        %vm1199 = vweird.f32 %v1194
        %v1200 = vsel %vm1199, %v1194, %v1198
        %v1201 = vmul.f32 %v1193, %v1200
        %v1202 = vsub.f32 %v1190, %v1201
        %v1203 = vmul.f32 %v1202, %v1202
        %v1204 = vsel %vm504, %v1203, 0.0
        %1205 = vadd.xlane.f32.xlu0 %v1204
        %v1206 = vpop.xlane.xlu0 %1205
        %v1207 = vmul.f32 %v1206, %v1200
        %v1208 = vadd.f32 %v1207, 1e-10
        %v1209 = vrsqrt.pop %v1208
        %v1210 = vmul.f32 %v1209, %v1208
        %v1211 = vmul.f32 %v1210, %v1209
        %v1212 = vmul.f32 0.5, %v1211
        %v1213 = vsub.f32 1.5, %v1212
        %v1214 = vmul.f32 %v1209, %v1213
        %vm1215 = vweird.f32 %v1208
        %vm1216 = vweird.f32 %v1209
        %vm1217 = vmor %vm1215, %vm1216
        %v1218 = vsel %vm1217, %v1209, %v1214
        %v1219 = vmul.f32 %v1202, %v1218
        %v1221 = vperm.slane %v487, 0
        %v1223 = vmul.f32 %v1219, %v1221
        %v1225 = vperm.slane %v488, 0
        %v1227 = vadd.f32 %v1223, %v1225
        %1228 = vst.msk [vmem:[%s481] sm:$0xff] %vm504, %v1227
        %s1229 = sand.u32 %s275, 1
        %s1230 = scalar_lea.sflag [#allocation4], %s1229
        %s1231 = sand.u32 %s275, 1
        %s1232 = smul.addr %s1231, 8
        %s1233 = scalar_lea.vmem [#allocation11], %s1232
        // Predicated region
        $region81: #{tpu_custom_call.1} parent=59 // pred_check
          %p1234 = pneg %p285
        $region82: #{tpu_custom_call.1} parent=59 // pred_check_branch
          %1236 = sbr.rel (%p1234) target = $region84
        $region83: #{tpu_custom_call.1} parent=59 // pred_region
          %1238 = vsyncadd %s1230, 0
          %s1239 = sadd.s32 %s36, %s35
          %s1240 = smul.addr %s1239, 8
          %s1241 = scalar_lea.hbm %s10, %s1240
          %s1243 = sshll.u32 %s1233, 4
          %s1244 = int_to_ptr.vmem [resolvable:$true] %s1243
          %s1245 = sshll.u32 %s1241, 4
          %s1246 = int_to_ptr.hbm [resolvable:$true] %s1245
          %1248 = dma.vmem_to_hbm [thread:$0]  %s1244, 128, %s1246, %s1230
        $region84: #{tpu_custom_call.1} parent=59 // pred_fallthru
          _
      $region60: #{tpu_custom_call.1} parent=5 // pred_fallthru
        _
      %p1249 = scmp.le.s32.totalorder 2, %s26
      // Predicated region
      $region85: #{tpu_custom_call.1} parent=5 // pred_check
        %p1250 = pneg %p1249
      $region86: #{tpu_custom_call.1} parent=5 // pred_check_branch
        %1252 = sbr.rel (%p1250) target = $region88
      $region87: #{tpu_custom_call.1} parent=5 // pred_region
        %s1253 = ssub.s32 %s26, 2
        // Predicated region
        $region89: #{tpu_custom_call.1} parent=87 // pred_check
          %p1254 = pneg %p291
        $region90: #{tpu_custom_call.1} parent=87 // pred_check_branch
          %1256 = sbr.rel (%p1254) target = $region92
        $region91: #{tpu_custom_call.1} parent=87 // pred_region
          %s1257 = sand.u32 %s276, 1
          %s1258 = scalar_lea.sflag [#allocation4], %s1257
          %s1259 = sand.u32 %s276, 1
          %s1260 = smul.addr %s1259, 8
          %s1261 = scalar_lea.vmem [#allocation11], %s1260
          %1263 = dma.done %s1258, 128
        $region92: #{tpu_custom_call.1} parent=87 // pred_fallthru
          _
      $region88: #{tpu_custom_call.1} parent=5 // pred_fallthru
        _
    $region6: #{tpu_custom_call.1} parent=1 // loop_footer
      %s30 = sadd.s32 1, %s26
    $region7: #{tpu_custom_call.1} parent=1 // loop_footer_branch
      %25 = sbr.rel target = $region3
    $region8: #{tpu_custom_call.1} parent=1 // loop_exit
      _
    %1264 = vsyncpa [#allocation3], 1
    %s1265 = scalar_lea.sflag [#allocation3], 1
    %1266 = vsyncpa %s1265, 1
    %1267 = vsyncpa [#allocation6], 1
    %s1268 = scalar_lea.sflag [#allocation6], 1
    %1269 = vsyncpa %s1268, 1
    %1270 = vsyncpa [#allocation9], 1
    %1271 = vsyncpa [#allocation4], 1
    %s1272 = scalar_lea.sflag [#allocation4], 1
    %1273 = vsyncpa %s1272, 1

</llo_original>
